<compile_context>
chip_gen: v7x
topology: tpu7x:2x2x1
jax: 0.10.0
libtpu: 0.0.40
codegen_flags: <defaults>
</compile_context>

<pallas_src>
import jax
import jax.numpy as jnp
from jax.experimental import pallas as pl
from jax.experimental.pallas import tpu as pltpu


_X_BLOCK_BUDGET_BYTES = 4 * 1024 * 1024   # per x input block (double-buffered by Pallas)
_VMEM_LIMIT_BYTES = 32 * 1024 * 1024      # safe on v5e/v6e/v7x physical VMEM


def _ceil_to(n, m):
    return ((n + m - 1) // m) * m


def _bilinear_seq_attn_kernel(x_ref, wy_ref, mask_ref, out_ref):
    # x_ref   : (BB, L, tD)  x dtype
    # wy_ref  : (BB, tD)     f32
    # mask_ref: (BB, L)      int32 (1 = masked position)
    # out_ref : (BB, L)      f32   -- VMEM-resident across the D-reduction grid axis
    k = pl.program_id(1)

    @pl.when(k == 0)
    def _():
        out_ref[...] = jnp.zeros_like(out_ref)

    x = x_ref[...]                                   # (BB, L, tD)
    wy = wy_ref[...]                                 # (BB, tD)
    # xWy[b, l] += sum_d x[b, l, d] * wy[b, d]  (VPU multiply + lane reduce, no transpose)
    out_ref[...] += jnp.sum(x * wy[:, None, :], axis=-1).astype(jnp.float32)

    @pl.when(k == pl.num_programs(1) - 1)
    def _():
        # masked_fill_(x_mask, -inf) + softmax over the sequence axis (eval-mode path)
        scores = jnp.where(mask_ref[...] != 0, -jnp.inf, out_ref[...])
        m = jnp.max(scores, axis=-1, keepdims=True)
        e = jnp.exp(scores - m)
        out_ref[...] = e / jnp.sum(e, axis=-1, keepdims=True)


def bilinear_seq_attn(x, y, w, b, x_mask):
    B, L, D = x.shape

    # Hoisted linear projection: one batched GEMM in XLA (full MXU occupancy) instead
    # of B tiny in-kernel GEMVs.
    wy = y.astype(jnp.float32) @ w.T.astype(jnp.float32) + b.astype(jnp.float32)  # (B, D)

    itemsize = jnp.dtype(x.dtype).itemsize
    row_bytes = max(L * D * itemsize, 1)

    if 8 * row_bytes <= _X_BLOCK_BUDGET_BYTES:
        # Common case: whole (L, D) rows per batch element; no D tiling, no L/D padding.
        t_d = D
        d_pad = D
        bb = max(8, (_X_BLOCK_BUDGET_BYTES // row_bytes) // 8 * 8)
        bb = min(bb, 512)
    else:
        # Large L*D: tile the reduction axis D in lane-aligned chunks.
        t_d = max(128, (_X_BLOCK_BUDGET_BYTES // (8 * L * itemsize)) // 128 * 128)
        t_d = min(t_d, _ceil_to(D, 128))
        d_pad = _ceil_to(D, t_d)
        bb = 8

    bb = min(bb, _ceil_to(B, 8))
    b_pad = _ceil_to(B, bb)

    # Pad only when required. In the aligned case x passes through untouched (no extra
    # HBM copy of the dominant operand). Padded batch rows get x=0, wy=0 and stay
    # UNMASKED so their (discarded) softmax is a finite uniform row (no NaNs).
    if b_pad != B or d_pad != D:
        x_in = jnp.zeros((b_pad, L, d_pad), x.dtype).at[:B, :, :D].set(x)
        wy_in = jnp.zeros((b_pad, d_pad), jnp.float32).at[:B, :D].set(wy)
    else:
        x_in, wy_in = x, wy
    if b_pad != B:
        mask_in = jnp.zeros((b_pad, L), jnp.int32).at[:B].set(x_mask.astype(jnp.int32))
    else:
        mask_in = x_mask.astype(jnp.int32)

    grid = (b_pad // bb, d_pad // t_d)

    cost = pl.CostEstimate(
        flops=2 * b_pad * L * d_pad + 5 * b_pad * L,
        transcendentals=b_pad * L,
        bytes_accessed=(b_pad * L * d_pad * itemsize   # x
                        + b_pad * d_pad * 4            # wy
                        + b_pad * L * 4                # mask
                        + b_pad * L * 4),              # out
    )

    out = pl.pallas_call(
        _bilinear_seq_attn_kernel,
        out_shape=jax.ShapeDtypeStruct((b_pad, L), jnp.float32),
        grid_spec=pltpu.PrefetchScalarGridSpec(
            num_scalar_prefetch=0,
            grid=grid,
            in_specs=[
                pl.BlockSpec((bb, L, t_d), lambda i, k: (i, 0, k)),  # x rows / D chunk
                pl.BlockSpec((bb, t_d), lambda i, k: (i, k)),        # Wy rows / D chunk
                pl.BlockSpec((bb, L), lambda i, k: (i, 0)),          # mask rows
            ],
            out_specs=pl.BlockSpec((bb, L), lambda i, k: (i, 0)),    # resident over k
        ),
        compiler_params=pltpu.CompilerParams(
            dimension_semantics=("parallel", "arbitrary"),
            vmem_limit_bytes=_VMEM_LIMIT_BYTES,
        ),
        cost_estimate=cost,
    )(x_in, wy_in, mask_in)

    return out[:B]


def reference(x, y, w, b, x_mask):
    wy = y @ w.T + b                                   # (B, D)
    xwy = jnp.einsum("bld,bd->bl", x, wy)              # (B, L)
    xwy = jnp.where(x_mask, -jnp.inf, xwy)
    return jax.nn.softmax(xwy, axis=-1)


if __name__ == "__main__":
    key = jax.random.PRNGKey(0)
    B, L, D, Hy = 2, 8, 32, 32   # batch, doc len, x_size, y_size

    kx, ky, kw, kb = jax.random.split(key, 4)
    x = jax.random.normal(kx, (B, L, D), dtype=jnp.float32)
    y = jax.random.normal(ky, (B, Hy), dtype=jnp.float32)

    # Deterministic parameter init for nn.Linear(y_size=Hy, x_size=D)
    bound = 1.0 / (Hy ** 0.5)
    w = jax.random.uniform(kw, (D, Hy), minval=-bound, maxval=bound,
                           dtype=jnp.float32)
    bias = jax.random.uniform(kb, (D,), minval=-bound, maxval=bound,
                              dtype=jnp.float32)

    # Padding mask: mask out the last two positions of each row (never all-True)
    x_mask = jnp.zeros((B, L), dtype=bool).at[:, L - 2:].set(True)

    out = bilinear_seq_attn(x, y, w, bias, x_mask)
    out = jax.block_until_ready(out)

    ref = reference(x, y, w, bias, x_mask)
    assert jnp.allclose(out, ref, atol=1e-5, rtol=1e-5), "mismatch vs reference"

    print("KERNEL_OK")
</pallas_src>

<mosaic_0001>
module attributes {stable_mosaic.version = 11 : i64} {
  func.func @_bilinear_seq_attn_kernel(%arg0: i32, %arg1: i32, %arg2: memref<8x8x32xf32, #tpu.memory_space<vmem>>, %arg3: memref<8x32xf32, #tpu.memory_space<vmem>>, %arg4: memref<8x8xi32, #tpu.memory_space<vmem>>, %arg5: memref<8x8xf32, #tpu.memory_space<vmem>>) attributes {dimension_semantics = [#tpu.dimension_semantics<parallel>, #tpu.dimension_semantics<arbitrary>], iteration_bounds = array<i64: 1, 1>, scalar_prefetch = 0 : i64, scratch_operands = 0 : i64, tpu.core_type = #tpu.core_type<tc>, window_params = [{transform_indices = @transform_0, window_bounds = array<i64: 8, 8, 32>}, {transform_indices = @transform_1, window_bounds = array<i64: 8, 32>}, {transform_indices = @transform_2, window_bounds = array<i64: 8, 8>}, {transform_indices = @transform_3, window_bounds = array<i64: 8, 8>}]} {
    %c0_i32 = arith.constant 0 : i32
    %0 = arith.cmpi eq, %arg1, %c0_i32 : i32
    %1 = arith.extui %0 : i1 to i32
    %c0_i32_0 = arith.constant 0 : i32
    %2 = arith.cmpi ne, %1, %c0_i32_0 : i32
    scf.if %2 {
      %cst_11 = arith.constant 0.000000e+00 : f32
      %15 = vector.broadcast %cst_11 : f32 to vector<8x8xf32>
      %c0_12 = arith.constant 0 : index
      %c0_13 = arith.constant 0 : index
      %16 = vector.load %arg5[%c0_12, %c0_13] : memref<8x8xf32, #tpu.memory_space<vmem>>, vector<8x8xf32>
      tpu.vector_store %arg5[%c0_12, %c0_13], %15 {strides = array<i32>} : memref<8x8xf32, #tpu.memory_space<vmem>>, vector<8x8xf32>,
    } else {
    }
    %c0 = arith.constant 0 : index
    %c0_1 = arith.constant 0 : index
    %c0_2 = arith.constant 0 : index
    %3 = vector.load %arg2[%c0, %c0_1, %c0_2] : memref<8x8x32xf32, #tpu.memory_space<vmem>>, vector<8x8x32xf32>
    %c0_3 = arith.constant 0 : index
    %c0_4 = arith.constant 0 : index
    %4 = vector.load %arg3[%c0_3, %c0_4] : memref<8x32xf32, #tpu.memory_space<vmem>>, vector<8x32xf32>
    %c0_5 = arith.constant 0 : index
    %c0_6 = arith.constant 0 : index
    %5 = vector.load %arg5[%c0_5, %c0_6] : memref<8x8xf32, #tpu.memory_space<vmem>>, vector<8x8xf32>
    %6 = vector.shape_cast %4 : vector<8x32xf32> to vector<8x1x32xf32>
    %7 = vector.broadcast %6 : vector<8x1x32xf32> to vector<8x8x32xf32>
    %8 = arith.mulf %3, %7 : vector<8x8x32xf32>
    %cst = arith.constant dense<0.000000e+00> : vector<8x8xf32>
    %9 = vector.multi_reduction <add>, %8, %cst [2] : vector<8x8x32xf32> to vector<8x8xf32>
    %10 = arith.addf %5, %9 : vector<8x8xf32>
    %c0_7 = arith.constant 0 : index
    %c0_8 = arith.constant 0 : index
    %11 = vector.load %arg5[%c0_7, %c0_8] : memref<8x8xf32, #tpu.memory_space<vmem>>, vector<8x8xf32>
    tpu.vector_store %arg5[%c0_7, %c0_8], %10 {strides = array<i32>} : memref<8x8xf32, #tpu.memory_space<vmem>>, vector<8x8xf32>,
    %c0_i32_9 = arith.constant 0 : i32
    %12 = arith.cmpi eq, %arg1, %c0_i32_9 : i32
    %13 = arith.extui %12 : i1 to i32
    %c0_i32_10 = arith.constant 0 : i32
    %14 = arith.cmpi ne, %13, %c0_i32_10 : i32
    scf.if %14 {
      %c0_11 = arith.constant 0 : index
      %c0_12 = arith.constant 0 : index
      %15 = vector.load %arg4[%c0_11, %c0_12] : memref<8x8xi32, #tpu.memory_space<vmem>>, vector<8x8xi32>
      %c0_i32_13 = arith.constant 0 : i32
      %16 = vector.broadcast %c0_i32_13 : i32 to vector<8x8xi32>
      %17 = arith.cmpi ne, %15, %16 : vector<8x8xi32>
      %c0_14 = arith.constant 0 : index
      %c0_15 = arith.constant 0 : index
      %18 = vector.load %arg5[%c0_14, %c0_15] : memref<8x8xf32, #tpu.memory_space<vmem>>, vector<8x8xf32>
      %cst_16 = arith.constant 0xFF800000 : f32
      %19 = vector.broadcast %cst_16 : f32 to vector<8x8xf32>
      %20 = arith.select %17, %19, %18 : vector<8x8xi1>, vector<8x8xf32>
      %cst_17 = arith.constant dense<0xFF800000> : vector<8xf32>
      %21 = vector.multi_reduction <maximumf>, %20, %cst_17 [1] : vector<8x8xf32> to vector<8xf32>
      %22 = vector.shape_cast %21 : vector<8xf32> to vector<8x1xf32>
      %23 = vector.broadcast %22 : vector<8x1xf32> to vector<8x8xf32>
      %24 = arith.subf %20, %23 : vector<8x8xf32>
      %25 = math.exp %24 : vector<8x8xf32>
      %cst_18 = arith.constant dense<0.000000e+00> : vector<8xf32>
      %26 = vector.multi_reduction <add>, %25, %cst_18 [1] : vector<8x8xf32> to vector<8xf32>
      %27 = vector.shape_cast %26 : vector<8xf32> to vector<8x1xf32>
      %28 = vector.broadcast %27 : vector<8x1xf32> to vector<8x8xf32>
      %29 = arith.divf %25, %28 : vector<8x8xf32>
      %c0_19 = arith.constant 0 : index
      %c0_20 = arith.constant 0 : index
      %30 = vector.load %arg5[%c0_19, %c0_20] : memref<8x8xf32, #tpu.memory_space<vmem>>, vector<8x8xf32>
      tpu.vector_store %arg5[%c0_19, %c0_20], %29 {strides = array<i32>} : memref<8x8xf32, #tpu.memory_space<vmem>>, vector<8x8xf32>,
    } else {
    }
    return
  }
  func.func @transform_0(%arg0: i32, %arg1: i32) -> (i32, i32, i32) {
    %c0_i32 = arith.constant 0 : i32
    %c0_i32_0 = arith.constant 0 : i32
    return %arg0, %c0_i32, %arg1 : i32, i32, i32
  }
  func.func @transform_1(%arg0: i32, %arg1: i32) -> (i32, i32) {
    %c0_i32 = arith.constant 0 : i32
    return %arg0, %arg1 : i32, i32
  }
  func.func @transform_2(%arg0: i32, %arg1: i32) -> (i32, i32) {
    %c0_i32 = arith.constant 0 : i32
    %c0_i32_0 = arith.constant 0 : i32
    return %arg0, %c0_i32 : i32, i32
  }
  func.func @transform_3(%arg0: i32, %arg1: i32) -> (i32, i32) {
    %c0_i32 = arith.constant 0 : i32
    %c0_i32_0 = arith.constant 0 : i32
    return %arg0, %c0_i32 : i32, i32
  }
}

</mosaic_0001>

<llo_original>
// kernel: tpu_custom_call.1
$region0: #{tpu_custom_call.1}
  #allocation0 [shape = 'u32[]', space=smem, size = 0x4, offset = 0x4, fixed_abs, tag = 'smem constant byte address 0x4 - core index']
  #allocation1 [shape = 'u32[144,128]{1,0:T(1,128)}', space=vmem, size = 0x12000, scoped, tag = 'internal scratch']
  %s0 = inlined_call_operand.hbm [shape: f32[8,8,32], index: 0, kind: input, shape index: {}]
  %s1 = inlined_call_operand.hbm [shape: f32[8,32], index: 1, kind: input, shape index: {}]
  %s2 = inlined_call_operand.hbm [shape: s32[8,8], index: 2, kind: input, shape index: {}]
  %s3 = inlined_call_operand.hbm [shape: f32[8,8], index: 3, kind: output, shape index: {}]
  %s4 = sld [smem:[#allocation0]]
  $region42: #{tpu_custom_call.1} parent=0
    _
  %s6 = ssub.s32 1, %s4
  %s7 = scalar_select 0, %s6, %s4
  $region1: #{tpu_custom_call.1} parent=0
    #allocation2 [shape = 'u8[32768]{0}', space=vmem, size = 0x8000, scoped, tag = 'input window, operand 0, single buffered']
    #allocation3 [shape = 's32[1]{0}', space=sflag, size = 0x4, scoped, tag = 'scoped memory for tpu_custom_call.1']
    #allocation4 [shape = 's32[1]{0}', space=sflag, size = 0x4, scoped, tag = 'scoped memory for tpu_custom_call.1']
    #allocation5 [shape = 'u8[4096]{0}', space=vmem, size = 0x1000, scoped, tag = 'input window, operand 1, single buffered']
    #allocation6 [shape = 's32[1]{0}', space=sflag, size = 0x4, scoped, tag = 'scoped memory for tpu_custom_call.1']
    #allocation7 [shape = 'u8[4096]{0}', space=vmem, size = 0x1000, scoped, tag = 'input window, operand 2, single buffered']
    #allocation8 [shape = 'u8[4096]{0}', space=vmem, size = 0x1000, scoped, tag = 'output window, operand 0, single buffered']
    %8 = vsyncpa [#allocation3], 0
    %9 = vsyncpa [#allocation6], 0
    %10 = vsyncpa [#allocation4], 0
    // Predicated region
    $region2: #{tpu_custom_call.1} parent=1 // pred_check
      _
    $region3: #{tpu_custom_call.1} parent=1 // pred_check_branch
      %12 = sbr.rel (0) target = $region5
    $region4: #{tpu_custom_call.1} parent=1 // pred_region
      %s14 = ssub.s32 1024, 1024
      %15 = vsyncadd [#allocation3], %s14
      %s16 = sshll.u32 [#allocation2], 4
      %s17 = int_to_ptr.vmem [resolvable:$true] %s16
      %22 = dma.hbm_to_vmem [thread:$0]  %s0, 1024, %s17, [#allocation3], 128, 128, 8
    $region5: #{tpu_custom_call.1} parent=1 // pred_fallthru
      _
    // Predicated region
    $region6: #{tpu_custom_call.1} parent=1 // pred_check
      _
    $region7: #{tpu_custom_call.1} parent=1 // pred_check_branch
      %24 = sbr.rel (0) target = $region9
    $region8: #{tpu_custom_call.1} parent=1 // pred_region
      %s26 = ssub.s32 128, 128
      %27 = vsyncadd [#allocation6], %s26
      %s29 = sshll.u32 [#allocation5], 4
      %s30 = int_to_ptr.vmem [resolvable:$true] %s29
      %32 = dma.hbm_to_vmem [thread:$0]  %s1, 128, %s30, [#allocation6]
    $region9: #{tpu_custom_call.1} parent=1 // pred_fallthru
      _
    // Predicated region
    $region10: #{tpu_custom_call.1} parent=1 // pred_check
      _
    $region11: #{tpu_custom_call.1} parent=1 // pred_check_branch
      %34 = sbr.rel (0) target = $region13
    $region12: #{tpu_custom_call.1} parent=1 // pred_region
      %s36 = ssub.s32 128, 128
      %37 = vsyncadd [#allocation6], %s36
      %s39 = sshll.u32 [#allocation7], 4
      %s40 = int_to_ptr.vmem [resolvable:$true] %s39
      %42 = dma.hbm_to_vmem [thread:$0]  %s2, 128, %s40, [#allocation6]
    $region13: #{tpu_custom_call.1} parent=1 // pred_fallthru
      _
    // Predicated region
    $region14: #{tpu_custom_call.1} parent=1 // pred_check
      _
    $region15: #{tpu_custom_call.1} parent=1 // pred_check_branch
      %44 = sbr.rel (0) target = $region17
    $region16: #{tpu_custom_call.1} parent=1 // pred_region
      %45 = dma.done [#allocation3], 1024
    $region17: #{tpu_custom_call.1} parent=1 // pred_fallthru
      _
    // Predicated region
    $region18: #{tpu_custom_call.1} parent=1 // pred_check
      _
    $region19: #{tpu_custom_call.1} parent=1 // pred_check_branch
      %47 = sbr.rel (0) target = $region21
    $region20: #{tpu_custom_call.1} parent=1 // pred_region
      %48 = dma.done [#allocation6], 128
    $region21: #{tpu_custom_call.1} parent=1 // pred_fallthru
      _
    // Predicated region
    $region22: #{tpu_custom_call.1} parent=1 // pred_check
      _
    $region23: #{tpu_custom_call.1} parent=1 // pred_check_branch
      %50 = sbr.rel (0) target = $region25
    $region24: #{tpu_custom_call.1} parent=1 // pred_region
      %51 = dma.done [#allocation6], 128
    $region25: #{tpu_custom_call.1} parent=1 // pred_fallthru
      _
    %p52 = scmp.eq.s32.totalorder 0, 0
    // Predicated region
    $region26: #{tpu_custom_call.1} parent=1 // pred_check
      %p53 = pneg %p52
    $region27: #{tpu_custom_call.1} parent=1 // pred_check_branch
      %55 = sbr.rel (%p53) target = $region29
    $region28: #{tpu_custom_call.1} parent=1 // pred_region
      %vm56 = vcmask 64512
      %57 = vst.msk [vmem:[#allocation8] sm:$0xff] %vm56, 0.0
    $region29: #{tpu_custom_call.1} parent=1 // pred_fallthru
      _
    %v58 = vld [vmem:[#allocation2] sm:$0xff]
    %v59 = vld [vmem:[#allocation2 + $0x8] sm:$0xff]
    %v60 = vld [vmem:[#allocation2 + $0x10] sm:$0xff]
    %v61 = vld [vmem:[#allocation2 + $0x18] sm:$0xff]
    %v62 = vld [vmem:[#allocation2 + $0x20] sm:$0xff]
    %v63 = vld [vmem:[#allocation2 + $0x28] sm:$0xff]
    %v64 = vld [vmem:[#allocation2 + $0x30] sm:$0xff]
    %v65 = vld [vmem:[#allocation2 + $0x38] sm:$0xff]
    %v66 = vld [vmem:[#allocation5] sm:$0xff]
    %v67 = vld [vmem:[#allocation8] sm:$0xff]
    %v69 = vcombine.high %v66, %v66
    %v71 = vunpack.c.l.s4 1966171168
    %v72 = vunpack.c.0.s8 %v71
    %v73 = vlaneseq
    %v74 = vshrl.u32 %v73, 7
    %v75 = vsub.s32 %v72, %v74
    %v76 = vrot.slane %v66, %v75
    %v78 = vunpack.c.l.s4 1966171168
    %v79 = vunpack.c.0.s8 %v78
    %v80 = vlaneseq
    %v81 = vshrl.u32 %v80, 7
    %v82 = vsub.s32 %v79, %v81
    %v83 = vrot.slane %v69, %v82
    %v84 = vcombine.high %v76, %v76
    %v85 = vcombine.high %v83, %v83
    %v87 = vunpack.c.l.s4 1966171168
    %v88 = vunpack.c.0.s8 %v87
    %v89 = vlaneseq
    %v90 = vshrl.u32 %v89, 7
    %v91 = vsub.s32 %v88, %v90
    %v92 = vrot.slane %v76, %v91
    %v94 = vunpack.c.l.s4 1966171168
    %v95 = vunpack.c.0.s8 %v94
    %v96 = vlaneseq
    %v97 = vshrl.u32 %v96, 7
    %v98 = vsub.s32 %v95, %v97
    %v99 = vrot.slane %v83, %v98
    %v101 = vunpack.c.l.s4 1966171168
    %v102 = vunpack.c.0.s8 %v101
    %v103 = vlaneseq
    %v104 = vshrl.u32 %v103, 7
    %v105 = vsub.s32 %v102, %v104
    %v106 = vrot.slane %v84, %v105
    %v108 = vunpack.c.l.s4 1966171168
    %v109 = vunpack.c.0.s8 %v108
    %v110 = vlaneseq
    %v111 = vshrl.u32 %v110, 7
    %v112 = vsub.s32 %v109, %v111
    %v113 = vrot.slane %v85, %v112
    %v114 = vcombine.high %v92, %v92
    %v115 = vcombine.high %v99, %v99
    %v116 = vcombine.high %v106, %v106
    %v117 = vcombine.high %v113, %v113
    %v118 = vlaneseq
    %v119 = vshrl.u32 %v118, 7
    %v120 = vsub.s32 0, %v119
    %v121 = vrot.slane %v92, %v120
    %v122 = vlaneseq
    %v123 = vshrl.u32 %v122, 7
    %v124 = vsub.s32 0, %v123
    %v125 = vrot.slane %v106, %v124
    %v126 = vlaneseq
    %v127 = vshrl.u32 %v126, 7
    %v128 = vsub.s32 0, %v127
    %v129 = vrot.slane %v114, %v128
    %v130 = vlaneseq
    %v131 = vshrl.u32 %v130, 7
    %v132 = vsub.s32 0, %v131
    %v133 = vrot.slane %v116, %v132
    %v134 = vlaneseq
    %v135 = vshrl.u32 %v134, 7
    %v136 = vsub.s32 0, %v135
    %v137 = vrot.slane %v99, %v136
    %v138 = vlaneseq
    %v139 = vshrl.u32 %v138, 7
    %v140 = vsub.s32 0, %v139
    %v141 = vrot.slane %v113, %v140
    %v142 = vlaneseq
    %v143 = vshrl.u32 %v142, 7
    %v144 = vsub.s32 0, %v143
    %v145 = vrot.slane %v115, %v144
    %v146 = vlaneseq
    %v147 = vshrl.u32 %v146, 7
    %v148 = vsub.s32 0, %v147
    %v149 = vrot.slane %v117, %v148
    %v158 = vmul.f32 %v58, %v121
    %v159 = vmul.f32 %v59, %v125
    %v160 = vmul.f32 %v60, %v129
    %v161 = vmul.f32 %v61, %v133
    %v162 = vmul.f32 %v62, %v137
    %v163 = vmul.f32 %v63, %v141
    %v164 = vmul.f32 %v64, %v145
    %v165 = vmul.f32 %v65, %v149
    %vm166 = vcmask 261120
    %v167 = vsel %vm166, %v158, 0.0
    %168 = vadd.xlane.f32.xlu0 %v167
    %v169 = vpop.xlane.xlu0 %168
    %v170 = vsel %vm166, %v159, 0.0
    %171 = vadd.xlane.f32.xlu0 %v170
    %v172 = vpop.xlane.xlu0 %171
    %v173 = vsel %vm166, %v160, 0.0
    %174 = vadd.xlane.f32.xlu0 %v173
    %v175 = vpop.xlane.xlu0 %174
    %v176 = vsel %vm166, %v161, 0.0
    %177 = vadd.xlane.f32.xlu0 %v176
    %v178 = vpop.xlane.xlu0 %177
    %v179 = vsel %vm166, %v162, 0.0
    %180 = vadd.xlane.f32.xlu0 %v179
    %v181 = vpop.xlane.xlu0 %180
    %v182 = vsel %vm166, %v163, 0.0
    %183 = vadd.xlane.f32.xlu0 %v182
    %v184 = vpop.xlane.xlu0 %183
    %v185 = vsel %vm166, %v164, 0.0
    %186 = vadd.xlane.f32.xlu0 %v185
    %v187 = vpop.xlane.xlu0 %186
    %v188 = vsel %vm166, %v165, 0.0
    %189 = vadd.xlane.f32.xlu0 %v188
    %v190 = vpop.xlane.xlu0 %189
    %v199 = vlaneseq
    %v200 = vand.u32 %v199, 127
    %v201 = vlaneseq
    %v202 = vshrl.u32 %v201, 7
    %v203 = vsub.s32 %v200, %v202
    %v204 = vrot.slane %v169, %v203
    %v205 = vlaneseq
    %v206 = vshrl.u32 %v205, 7
    %v207 = vsub.s32 %v200, %v206
    %v208 = vrot.slane %v172, %v207
    %v209 = vlaneseq
    %v210 = vshrl.u32 %v209, 7
    %v211 = vsub.s32 %v200, %v210
    %v212 = vrot.slane %v175, %v211
    %v213 = vlaneseq
    %v214 = vshrl.u32 %v213, 7
    %v215 = vsub.s32 %v200, %v214
    %v216 = vrot.slane %v178, %v215
    %v217 = vlaneseq
    %v218 = vshrl.u32 %v217, 7
    %v219 = vsub.s32 %v200, %v218
    %v220 = vrot.slane %v181, %v219
    %v221 = vlaneseq
    %v222 = vshrl.u32 %v221, 7
    %v223 = vsub.s32 %v200, %v222
    %v224 = vrot.slane %v184, %v223
    %v225 = vlaneseq
    %v226 = vshrl.u32 %v225, 7
    %v227 = vsub.s32 %v200, %v226
    %v228 = vrot.slane %v187, %v227
    %v229 = vlaneseq
    %v230 = vshrl.u32 %v229, 7
    %v231 = vsub.s32 %v200, %v230
    %v232 = vrot.slane %v190, %v231
    %vm233 = vcmask 1041409
    %v234 = vsel %vm233, %v208, %v204
    %vm235 = vcmask 1042434
    %v236 = vsel %vm235, %v212, %v234
    %vm237 = vcmask 1043459
    %v238 = vsel %vm237, %v216, %v236
    %vm239 = vcmask 1044484
    %v240 = vsel %vm239, %v220, %v238
    %vm241 = vcmask 1045509
    %v242 = vsel %vm241, %v224, %v240
    %vm243 = vcmask 1046534
    %v244 = vsel %vm243, %v228, %v242
    %vm245 = vcmask 1047559
    %v246 = vsel %vm245, %v232, %v244
    %v248 = vadd.f32 %v67, %v246
    %vm249 = vcmask 64512
    %250 = vst.msk [vmem:[#allocation8] sm:$0xff] %vm249, %v248
    // Predicated region
    $region30: #{tpu_custom_call.1} parent=1 // pred_check
      %p251 = pneg %p52
    $region31: #{tpu_custom_call.1} parent=1 // pred_check_branch
      %253 = sbr.rel (%p251) target = $region33
    $region32: #{tpu_custom_call.1} parent=1 // pred_region
      %v254 = vld [vmem:[#allocation7] sm:$0xff]
      %vm255 = vcmp.ne.s32.totalorder %v254, 0
      %v256 = vld [vmem:[#allocation8] sm:$0xff]
      %v257 = vsel %vm255, -inf, %v256
      %v258 = vsel %vm249, %v257, -inf
      %259 = vmax.xlane.f32.xlu0 %v258
      %v260 = vpop.xlane.xlu0 %259
      %v261 = vsub.f32 %v257, %v260
      %v262 = vmul.f32 %v261, 1.442695
      %v263 = vpow.pop %v262
      %v264 = vsel %vm249, %v263, 0.0
      %265 = vadd.xlane.f32.xlu0 %v264
      %v266 = vpop.xlane.xlu0 %265
      %v267 = vrcp.pop %v266
      %v268 = vmul.f32 %v263, %v267
      %269 = vst.msk [vmem:[#allocation8] sm:$0xff] %vm249, %v268
    $region33: #{tpu_custom_call.1} parent=1 // pred_fallthru
      _
    // Predicated region
    $region34: #{tpu_custom_call.1} parent=1 // pred_check
      _
    $region35: #{tpu_custom_call.1} parent=1 // pred_check_branch
      %271 = sbr.rel (0) target = $region37
    $region36: #{tpu_custom_call.1} parent=1 // pred_region
      %s273 = ssub.s32 128, 128
      %274 = vsyncadd [#allocation4], %s273
      %s276 = sshll.u32 [#allocation8], 4
      %s277 = int_to_ptr.vmem [resolvable:$true] %s276
      %279 = dma.vmem_to_hbm [thread:$0]  %s277, 128, %s3, [#allocation4]
    $region37: #{tpu_custom_call.1} parent=1 // pred_fallthru
      _
    // Predicated region
    $region38: #{tpu_custom_call.1} parent=1 // pred_check
      _
    $region39: #{tpu_custom_call.1} parent=1 // pred_check_branch
      %281 = sbr.rel (0) target = $region41
    $region40: #{tpu_custom_call.1} parent=1 // pred_region
      %282 = dma.done [#allocation4], 128
    $region41: #{tpu_custom_call.1} parent=1 // pred_fallthru
      _
    %283 = vsyncpa [#allocation3], 1
    %284 = vsyncpa [#allocation6], 1
    %285 = vsyncpa [#allocation4], 1

</llo_original>
